<compile_context>
chip_gen: v6e
topology: v6e:2x2x1
jax: 0.10.0
libtpu: 0.0.40
codegen_flags: <defaults>
</compile_context>

<pallas_src>
import math

import jax
import jax.numpy as jnp
from jax import lax
from jax.experimental import pallas as pl
from jax.experimental.pallas import tpu as pltpu


# ----------------------------------------------------------------------------------
# In-kernel math helpers (VPU-only).  Cephes single-precision atan approximation.
# ----------------------------------------------------------------------------------
_PI = math.pi
_PI_2 = math.pi / 2.0
_PI_4 = math.pi / 4.0
_TAN_PI_8 = 0.4142135623730951   # tan(pi/8)
_TAN_3PI_8 = 2.414213562373095   # tan(3*pi/8)


def _atan(x):
    sgn = jnp.where(x < 0.0, -1.0, 1.0).astype(x.dtype)
    ax = jnp.abs(x)
    hi = ax > _TAN_3PI_8
    mid = ax > _TAN_PI_8
    safe_ax = jnp.maximum(ax, 1e-30)
    xr = jnp.where(hi, -1.0 / safe_ax, jnp.where(mid, (ax - 1.0) / (ax + 1.0), ax))
    off = jnp.where(hi, _PI_2, jnp.where(mid, _PI_4, 0.0)).astype(x.dtype)
    z = xr * xr
    p = ((8.05374449538e-2 * z - 1.38776856032e-1) * z + 1.99777106478e-1) * z \
        - 3.33329491539e-1
    return sgn * (off + (p * z * xr + xr))


def _atan2(y, x):
    safe_x = jnp.where(x == 0.0, 1.0, x)
    res = _atan(y / safe_x)
    res = res + jnp.where(x < 0.0, jnp.where(y >= 0.0, _PI, -_PI), 0.0).astype(y.dtype)
    res = jnp.where(
        x == 0.0,
        jnp.where(y > 0.0, _PI_2, jnp.where(y < 0.0, -_PI_2, 0.0)).astype(y.dtype),
        res,
    )
    return res


def _acos(v):
    # acos(v) = atan2(sqrt((1-v)(1+v)), v); product form avoids cancellation near |v|=1.
    s = jnp.sqrt(jnp.maximum((1.0 - v) * (1.0 + v), 0.0))
    return _atan2(s, v)


# ----------------------------------------------------------------------------------
# Kernel
# ----------------------------------------------------------------------------------
def _spacetime_kernel(x_ref, c_ref, wr_ref, wp_ref, wt_ref, wa_ref, o_ref):
    # x_ref:  (TB, 4)          xyzt batch tile (streamed)
    # c_ref:  (3, DS)          spherical centers, transposed (VMEM-resident)
    # wr_ref: (DS, depth*dim)  placed projection weight for rho   (resident)
    # wp_ref: (DS, depth*dim)  placed projection weight for phi   (resident)
    # wt_ref: (DS, depth*dim)  placed projection weight for theta (resident)
    # wa_ref: (2,  depth*dim)  placed angle-embedding weight      (resident)
    # o_ref:  (TB, depth*dim)  lane-dense flattened output tile
    v = x_ref[...]
    c = c_ref[...]
    cx, cy, cz = c[0:1, :], c[1:2, :], c[2:3, :]          # (1, DS) each

    x, y, z, t = v[:, 0:1], v[:, 1:2], v[:, 2:3], v[:, 3:4]
    ex, ey, ez = x - cx, y - cy, z - cz                   # (TB, DS)

    rho = jnp.sqrt(ex * ex + ey * ey + ez * ez)           # (TB, DS)
    phi = _atan2(ey, ex)                                  # (TB, DS)
    theta = _acos(ez / rho)                               # (TB, DS)

    # [sin t, cos t] as a (TB, 2) block without a lane concat: cos(t) == sin(t + pi/2).
    shift = lax.broadcasted_iota(jnp.int32, (1, 2), 1).astype(v.dtype) * _PI_2
    sincos = jnp.sin(t + shift)                           # (TB, 2)

    # All linear layers run on the MXU against precomputed placed weights (f32 accumulate).
    out = jnp.dot(rho, wr_ref[...], preferred_element_type=jnp.float32)
    out = out + jnp.dot(phi, wp_ref[...], preferred_element_type=jnp.float32)
    out = out + jnp.dot(theta, wt_ref[...], preferred_element_type=jnp.float32)
    out = out + jnp.dot(sincos, wa_ref[...], preferred_element_type=jnp.float32)
    o_ref[...] = out.astype(o_ref.dtype)


# ----------------------------------------------------------------------------------
# Wrapper
# ----------------------------------------------------------------------------------
def _round_up(x, m):
    return ((x + m - 1) // m) * m


def spacetime_embedding(xyzt, centers, random_projection, w1, w2,
                        *, block_rows=1024, out_dtype=None):
    """Pallas-TPU forward of SpaceTimeEmbedding.

    xyzt:              (B, 4) float32
    centers:           (depth-1, 3)        SphericalEmbedding.centers
    random_projection: (depth-1, 3, dim)   SphericalEmbedding.random_projection
    w1:                (1, 2)              AngleEmbedding.linear_layer_1.weight (bias=False)
    w2:                (dim, 1)            AngleEmbedding.linear_layer_2.weight (bias=False)
    returns:           (B, depth, dim)
    """
    B, c4 = xyzt.shape
    assert c4 == 4, "SpaceTimeEmbedding expects xyzt with last dim = 4"
    ds, three, dim = random_projection.shape
    assert three == 3
    depth = ds + 1
    D = depth * dim
    out_dtype = xyzt.dtype if out_dtype is None else out_dtype
    f32 = jnp.float32

    # --- fold every linear layer into "placement" weights (tiny, one-time plain-JAX prep) ---
    eye = jnp.eye(ds, dtype=f32)
    rp = random_projection.astype(f32)
    # w_sph[c][d, d*dim + j] = random_projection[d, c, j], zero elsewhere; c = rho/phi/theta.
    w_sph = [
        jnp.pad((eye[:, :, None] * rp[None, :, c, :]).reshape(ds, ds * dim),
                ((0, 0), (0, dim)))                                   # (ds, D)
        for c in range(3)
    ]
    # w_ang[e, ds*dim + j] = w1[0, e] * w2[j, 0]   (row 0: sin, row 1: cos)
    w_ang = jnp.pad(jnp.outer(w1[0, :], w2[:, 0]).astype(f32),
                    ((0, 0), (ds * dim, 0)))                          # (2, D)
    centers_t = centers.astype(f32).T                                  # (3, ds)

    # --- batch tiling: pad B up to a multiple of the row tile (multiple of 8) ---
    tb = max(8, min(_round_up(block_rows, 8), _round_up(B, 8)))
    Bp = _round_up(B, tb)
    xp = xyzt.astype(f32)
    if Bp != B:
        xp = jnp.pad(xp, ((0, Bp - B), (0, 0)))

    grid = (Bp // tb,)
    out_flat = pl.pallas_call(
        _spacetime_kernel,
        out_shape=jax.ShapeDtypeStruct((Bp, D), out_dtype),
        grid=grid,
        in_specs=[
            pl.BlockSpec((tb, 4), lambda b: (b, 0)),        # streamed batch tile
            pl.BlockSpec((3, ds), lambda b: (0, 0)),        # resident centers^T
            pl.BlockSpec((ds, D), lambda b: (0, 0)),        # resident Wrho
            pl.BlockSpec((ds, D), lambda b: (0, 0)),        # resident Wphi
            pl.BlockSpec((ds, D), lambda b: (0, 0)),        # resident Wtheta
            pl.BlockSpec((2, D), lambda b: (0, 0)),         # resident Wang
        ],
        out_specs=pl.BlockSpec((tb, D), lambda b: (b, 0)),  # lane-dense flattened output
        compiler_params=pltpu.CompilerParams(
            dimension_semantics=("parallel",),              # megacore sharding on v7x
            vmem_limit_bytes=32 * 1024 * 1024,              # explicit; safe on v5e/v6e/v7x
        ),
    )(xp, centers_t, w_sph[0], w_sph[1], w_sph[2], w_ang)

    return out_flat[:B].reshape(B, depth, dim)


# ----------------------------------------------------------------------------------
# Pure-JAX reference mirroring the PyTorch forward (exact f32 elementwise math).
# ----------------------------------------------------------------------------------
def spacetime_embedding_ref(xyzt, centers, random_projection, w1, w2):
    xyz, t = xyzt[:, :3], xyzt[:, 3:4]
    # SphericalEmbedding
    x_exp = xyz[:, None, :] - centers[None, :, :]                        # (B, ds, 3)
    rho = jnp.sqrt(jnp.sum(x_exp ** 2, axis=-1))                         # (B, ds)
    phi = jnp.arctan2(x_exp[:, :, 1], x_exp[:, :, 0])
    theta = jnp.arccos(x_exp[:, :, 2] / rho)
    sph = jnp.stack([rho, phi, theta], axis=-1)                          # (B, ds, 3)
    proj = jnp.sum(sph[:, :, :, None] * random_projection[None], axis=2)  # (B, ds, dim)
    # AngleEmbedding on t (input_dim=1, depth=1, both Linears bias=False)
    x_aug = jnp.stack([jnp.sin(t), jnp.cos(t)], axis=-1)                 # (B, 1, 2)
    p = jnp.sum(x_aug[:, :, None, :] * w1[None, None, :, :], axis=-1)    # (B, 1, 1)
    p = jnp.transpose(p, (0, 2, 1))                                      # b i d -> b d i
    ang = jnp.sum(p[:, :, None, :] * w2[None, None, :, :], axis=-1)      # (B, 1, dim)
    return jnp.concatenate([proj, ang], axis=-2)                         # (B, depth, dim)


if __name__ == "__main__":
    B = 50
    projection_dim, depth = 8, 8
    ds = depth - 1                       # spherical depth = 7, time (angle) depth = 1

    key = jax.random.PRNGKey(0)
    kx, kc, kp, k1, k2 = jax.random.split(key, 5)
    xyzt = jax.random.normal(kx, (B, 4), dtype=jnp.float32)
    centers = jax.random.normal(kc, (ds, 3), dtype=jnp.float32)
    random_projection = jax.random.normal(kp, (ds, 3, projection_dim), dtype=jnp.float32)
    w1 = jax.random.normal(k1, (1, 2), dtype=jnp.float32) * 0.5              # Linear(2, 1, bias=False)
    w2 = jax.random.normal(k2, (projection_dim, 1), dtype=jnp.float32) * 0.5  # Linear(1, dim, bias=False)

    # Small block_rows here just to exercise multiple pipelined grid steps + ragged padding.
    out = spacetime_embedding(xyzt, centers, random_projection, w1, w2, block_rows=16)
    out = jax.block_until_ready(out)

    ref = spacetime_embedding_ref(xyzt, centers, random_projection, w1, w2)
    assert out.shape == (B, depth, projection_dim), out.shape
    err = float(jnp.max(jnp.abs(out - ref)))
    # ~1e-5 on the f32 MXU path; tolerance leaves headroom for MXU rounding.
    assert err < 5e-2, f"mismatch vs reference: max abs err = {err}"
    print("KERNEL_OK")
</pallas_src>

<mosaic_0001>
module attributes {stable_mosaic.version = 11 : i64} {
  func.func @_spacetime_kernel(%arg0: i32, %arg1: memref<16x4xf32, #tpu.memory_space<vmem>>, %arg2: memref<3x7xf32, #tpu.memory_space<vmem>>, %arg3: memref<7x64xf32, #tpu.memory_space<vmem>>, %arg4: memref<7x64xf32, #tpu.memory_space<vmem>>, %arg5: memref<7x64xf32, #tpu.memory_space<vmem>>, %arg6: memref<2x64xf32, #tpu.memory_space<vmem>>, %arg7: memref<16x64xf32, #tpu.memory_space<vmem>>) attributes {dimension_semantics = [#tpu.dimension_semantics<parallel>], iteration_bounds = array<i64: 4>, scalar_prefetch = 0 : i64, scratch_operands = 0 : i64, tpu.core_type = #tpu.core_type<tc>, window_params = [{transform_indices = @transform_0, window_bounds = array<i64: 16, 4>}, {pipeline_mode = #tpu.pipeline_mode<synchronous>, transform_indices = @transform_1, window_bounds = array<i64: 3, 7>}, {pipeline_mode = #tpu.pipeline_mode<synchronous>, transform_indices = @transform_2, window_bounds = array<i64: 7, 64>}, {pipeline_mode = #tpu.pipeline_mode<synchronous>, transform_indices = @transform_3, window_bounds = array<i64: 7, 64>}, {pipeline_mode = #tpu.pipeline_mode<synchronous>, transform_indices = @transform_4, window_bounds = array<i64: 7, 64>}, {pipeline_mode = #tpu.pipeline_mode<synchronous>, transform_indices = @transform_5, window_bounds = array<i64: 2, 64>}, {transform_indices = @transform_6, window_bounds = array<i64: 16, 64>}]} {
    %c0 = arith.constant 0 : index
    %c0_0 = arith.constant 0 : index
    %0 = vector.load %arg1[%c0, %c0_0] : memref<16x4xf32, #tpu.memory_space<vmem>>, vector<16x4xf32>
    %c0_1 = arith.constant 0 : index
    %c0_2 = arith.constant 0 : index
    %1 = vector.load %arg2[%c0_1, %c0_2] : memref<3x7xf32, #tpu.memory_space<vmem>>, vector<3x7xf32>
    %2 = vector.extract_strided_slice %1 {offsets = [0, 0], sizes = [1, 7], strides = [1, 1]} : vector<3x7xf32> to vector<1x7xf32>
    %3 = vector.extract_strided_slice %1 {offsets = [1, 0], sizes = [1, 7], strides = [1, 1]} : vector<3x7xf32> to vector<1x7xf32>
    %4 = vector.extract_strided_slice %1 {offsets = [2, 0], sizes = [1, 7], strides = [1, 1]} : vector<3x7xf32> to vector<1x7xf32>
    %5 = vector.extract_strided_slice %0 {offsets = [0, 0], sizes = [16, 1], strides = [1, 1]} : vector<16x4xf32> to vector<16x1xf32>
    %6 = vector.extract_strided_slice %0 {offsets = [0, 1], sizes = [16, 1], strides = [1, 1]} : vector<16x4xf32> to vector<16x1xf32>
    %7 = vector.extract_strided_slice %0 {offsets = [0, 2], sizes = [16, 1], strides = [1, 1]} : vector<16x4xf32> to vector<16x1xf32>
    %8 = vector.extract_strided_slice %0 {offsets = [0, 3], sizes = [16, 1], strides = [1, 1]} : vector<16x4xf32> to vector<16x1xf32>
    %9 = vector.broadcast %5 : vector<16x1xf32> to vector<16x7xf32>
    %10 = vector.broadcast %2 : vector<1x7xf32> to vector<16x7xf32>
    %11 = arith.subf %9, %10 : vector<16x7xf32>
    %12 = vector.broadcast %6 : vector<16x1xf32> to vector<16x7xf32>
    %13 = vector.broadcast %3 : vector<1x7xf32> to vector<16x7xf32>
    %14 = arith.subf %12, %13 : vector<16x7xf32>
    %15 = vector.broadcast %7 : vector<16x1xf32> to vector<16x7xf32>
    %16 = vector.broadcast %4 : vector<1x7xf32> to vector<16x7xf32>
    %17 = arith.subf %15, %16 : vector<16x7xf32>
    %18 = arith.mulf %11, %11 : vector<16x7xf32>
    %19 = arith.mulf %14, %14 : vector<16x7xf32>
    %20 = arith.addf %18, %19 : vector<16x7xf32>
    %21 = arith.mulf %17, %17 : vector<16x7xf32>
    %22 = arith.addf %20, %21 : vector<16x7xf32>
    %23 = math.sqrt %22 : vector<16x7xf32>
    %cst = arith.constant 0.000000e+00 : f32
    %24 = vector.broadcast %cst : f32 to vector<16x7xf32>
    %25 = arith.cmpf oeq, %11, %24 : vector<16x7xf32>
    %cst_3 = arith.constant 1.000000e+00 : f32
    %26 = vector.broadcast %cst_3 : f32 to vector<16x7xf32>
    %27 = arith.select %25, %26, %11 : vector<16x7xi1>, vector<16x7xf32>
    %28 = arith.divf %14, %27 : vector<16x7xf32>
    %cst_4 = arith.constant 0.000000e+00 : f32
    %29 = vector.broadcast %cst_4 : f32 to vector<16x7xf32>
    %30 = arith.cmpf olt, %28, %29 : vector<16x7xf32>
    %cst_5 = arith.constant -1.000000e+00 : f32
    %cst_6 = arith.constant 1.000000e+00 : f32
    %31 = vector.broadcast %cst_5 : f32 to vector<16x7xf32>
    %32 = vector.broadcast %cst_6 : f32 to vector<16x7xf32>
    %33 = arith.select %30, %31, %32 : vector<16x7xi1>, vector<16x7xf32>
    %34 = math.absf %28 : vector<16x7xf32>
    %cst_7 = arith.constant 2.41421366 : f32
    %35 = vector.broadcast %cst_7 : f32 to vector<16x7xf32>
    %36 = arith.cmpf ogt, %34, %35 : vector<16x7xf32>
    %cst_8 = arith.constant 0.414213568 : f32
    %37 = vector.broadcast %cst_8 : f32 to vector<16x7xf32>
    %38 = arith.cmpf ogt, %34, %37 : vector<16x7xf32>
    %cst_9 = arith.constant 1.000000e-30 : f32
    %39 = vector.broadcast %cst_9 : f32 to vector<16x7xf32>
    %40 = arith.maximumf %34, %39 : vector<16x7xf32>
    %cst_10 = arith.constant -1.000000e+00 : f32
    %41 = vector.broadcast %cst_10 : f32 to vector<16x7xf32>
    %42 = arith.divf %41, %40 : vector<16x7xf32>
    %cst_11 = arith.constant 1.000000e+00 : f32
    %43 = vector.broadcast %cst_11 : f32 to vector<16x7xf32>
    %44 = arith.subf %34, %43 : vector<16x7xf32>
    %cst_12 = arith.constant 1.000000e+00 : f32
    %45 = vector.broadcast %cst_12 : f32 to vector<16x7xf32>
    %46 = arith.addf %34, %45 : vector<16x7xf32>
    %47 = arith.divf %44, %46 : vector<16x7xf32>
    %48 = arith.select %38, %47, %34 : vector<16x7xi1>, vector<16x7xf32>
    %49 = arith.select %36, %42, %48 : vector<16x7xi1>, vector<16x7xf32>
    %cst_13 = arith.constant 0.785398185 : f32
    %cst_14 = arith.constant 0.000000e+00 : f32
    %50 = vector.broadcast %cst_13 : f32 to vector<16x7xf32>
    %51 = vector.broadcast %cst_14 : f32 to vector<16x7xf32>
    %52 = arith.select %38, %50, %51 : vector<16x7xi1>, vector<16x7xf32>
    %cst_15 = arith.constant 1.57079637 : f32
    %53 = vector.broadcast %cst_15 : f32 to vector<16x7xf32>
    %54 = arith.select %36, %53, %52 : vector<16x7xi1>, vector<16x7xf32>
    %55 = arith.mulf %49, %49 : vector<16x7xf32>
    %cst_16 = arith.constant 0.0805374458 : f32
    %56 = vector.broadcast %cst_16 : f32 to vector<16x7xf32>
    %57 = arith.mulf %56, %55 : vector<16x7xf32>
    %cst_17 = arith.constant 0.138776854 : f32
    %58 = vector.broadcast %cst_17 : f32 to vector<16x7xf32>
    %59 = arith.subf %57, %58 : vector<16x7xf32>
    %60 = arith.mulf %59, %55 : vector<16x7xf32>
    %cst_18 = arith.constant 0.199777111 : f32
    %61 = vector.broadcast %cst_18 : f32 to vector<16x7xf32>
    %62 = arith.addf %60, %61 : vector<16x7xf32>
    %63 = arith.mulf %62, %55 : vector<16x7xf32>
    %cst_19 = arith.constant 0.333329499 : f32
    %64 = vector.broadcast %cst_19 : f32 to vector<16x7xf32>
    %65 = arith.subf %63, %64 : vector<16x7xf32>
    %66 = arith.mulf %65, %55 : vector<16x7xf32>
    %67 = arith.mulf %66, %49 : vector<16x7xf32>
    %68 = arith.addf %67, %49 : vector<16x7xf32>
    %69 = arith.addf %54, %68 : vector<16x7xf32>
    %70 = arith.mulf %33, %69 : vector<16x7xf32>
    %cst_20 = arith.constant 0.000000e+00 : f32
    %71 = vector.broadcast %cst_20 : f32 to vector<16x7xf32>
    %72 = arith.cmpf olt, %11, %71 : vector<16x7xf32>
    %cst_21 = arith.constant 0.000000e+00 : f32
    %73 = vector.broadcast %cst_21 : f32 to vector<16x7xf32>
    %74 = arith.cmpf oge, %14, %73 : vector<16x7xf32>
    %cst_22 = arith.constant 3.14159274 : f32
    %cst_23 = arith.constant -3.14159274 : f32
    %75 = vector.broadcast %cst_22 : f32 to vector<16x7xf32>
    %76 = vector.broadcast %cst_23 : f32 to vector<16x7xf32>
    %77 = arith.select %74, %75, %76 : vector<16x7xi1>, vector<16x7xf32>
    %cst_24 = arith.constant 0.000000e+00 : f32
    %78 = vector.broadcast %cst_24 : f32 to vector<16x7xf32>
    %79 = arith.select %72, %77, %78 : vector<16x7xi1>, vector<16x7xf32>
    %80 = arith.addf %70, %79 : vector<16x7xf32>
    %cst_25 = arith.constant 0.000000e+00 : f32
    %81 = vector.broadcast %cst_25 : f32 to vector<16x7xf32>
    %82 = arith.cmpf oeq, %11, %81 : vector<16x7xf32>
    %cst_26 = arith.constant 0.000000e+00 : f32
    %83 = vector.broadcast %cst_26 : f32 to vector<16x7xf32>
    %84 = arith.cmpf ogt, %14, %83 : vector<16x7xf32>
    %cst_27 = arith.constant 0.000000e+00 : f32
    %85 = vector.broadcast %cst_27 : f32 to vector<16x7xf32>
    %86 = arith.cmpf olt, %14, %85 : vector<16x7xf32>
    %cst_28 = arith.constant -1.57079637 : f32
    %cst_29 = arith.constant 0.000000e+00 : f32
    %87 = vector.broadcast %cst_28 : f32 to vector<16x7xf32>
    %88 = vector.broadcast %cst_29 : f32 to vector<16x7xf32>
    %89 = arith.select %86, %87, %88 : vector<16x7xi1>, vector<16x7xf32>
    %cst_30 = arith.constant 1.57079637 : f32
    %90 = vector.broadcast %cst_30 : f32 to vector<16x7xf32>
    %91 = arith.select %84, %90, %89 : vector<16x7xi1>, vector<16x7xf32>
    %92 = arith.select %82, %91, %80 : vector<16x7xi1>, vector<16x7xf32>
    %93 = arith.divf %17, %23 : vector<16x7xf32>
    %cst_31 = arith.constant 1.000000e+00 : f32
    %94 = vector.broadcast %cst_31 : f32 to vector<16x7xf32>
    %95 = arith.subf %94, %93 : vector<16x7xf32>
    %cst_32 = arith.constant 1.000000e+00 : f32
    %96 = vector.broadcast %cst_32 : f32 to vector<16x7xf32>
    %97 = arith.addf %96, %93 : vector<16x7xf32>
    %98 = arith.mulf %95, %97 : vector<16x7xf32>
    %cst_33 = arith.constant 0.000000e+00 : f32
    %99 = vector.broadcast %cst_33 : f32 to vector<16x7xf32>
    %100 = arith.maximumf %98, %99 : vector<16x7xf32>
    %101 = math.sqrt %100 : vector<16x7xf32>
    %cst_34 = arith.constant 0.000000e+00 : f32
    %102 = vector.broadcast %cst_34 : f32 to vector<16x7xf32>
    %103 = arith.cmpf oeq, %93, %102 : vector<16x7xf32>
    %cst_35 = arith.constant 1.000000e+00 : f32
    %104 = vector.broadcast %cst_35 : f32 to vector<16x7xf32>
    %105 = arith.select %103, %104, %93 : vector<16x7xi1>, vector<16x7xf32>
    %106 = arith.divf %101, %105 : vector<16x7xf32>
    %cst_36 = arith.constant 0.000000e+00 : f32
    %107 = vector.broadcast %cst_36 : f32 to vector<16x7xf32>
    %108 = arith.cmpf olt, %106, %107 : vector<16x7xf32>
    %cst_37 = arith.constant -1.000000e+00 : f32
    %cst_38 = arith.constant 1.000000e+00 : f32
    %109 = vector.broadcast %cst_37 : f32 to vector<16x7xf32>
    %110 = vector.broadcast %cst_38 : f32 to vector<16x7xf32>
    %111 = arith.select %108, %109, %110 : vector<16x7xi1>, vector<16x7xf32>
    %112 = math.absf %106 : vector<16x7xf32>
    %cst_39 = arith.constant 2.41421366 : f32
    %113 = vector.broadcast %cst_39 : f32 to vector<16x7xf32>
    %114 = arith.cmpf ogt, %112, %113 : vector<16x7xf32>
    %cst_40 = arith.constant 0.414213568 : f32
    %115 = vector.broadcast %cst_40 : f32 to vector<16x7xf32>
    %116 = arith.cmpf ogt, %112, %115 : vector<16x7xf32>
    %cst_41 = arith.constant 1.000000e-30 : f32
    %117 = vector.broadcast %cst_41 : f32 to vector<16x7xf32>
    %118 = arith.maximumf %112, %117 : vector<16x7xf32>
    %cst_42 = arith.constant -1.000000e+00 : f32
    %119 = vector.broadcast %cst_42 : f32 to vector<16x7xf32>
    %120 = arith.divf %119, %118 : vector<16x7xf32>
    %cst_43 = arith.constant 1.000000e+00 : f32
    %121 = vector.broadcast %cst_43 : f32 to vector<16x7xf32>
    %122 = arith.subf %112, %121 : vector<16x7xf32>
    %cst_44 = arith.constant 1.000000e+00 : f32
    %123 = vector.broadcast %cst_44 : f32 to vector<16x7xf32>
    %124 = arith.addf %112, %123 : vector<16x7xf32>
    %125 = arith.divf %122, %124 : vector<16x7xf32>
    %126 = arith.select %116, %125, %112 : vector<16x7xi1>, vector<16x7xf32>
    %127 = arith.select %114, %120, %126 : vector<16x7xi1>, vector<16x7xf32>
    %cst_45 = arith.constant 0.785398185 : f32
    %cst_46 = arith.constant 0.000000e+00 : f32
    %128 = vector.broadcast %cst_45 : f32 to vector<16x7xf32>
    %129 = vector.broadcast %cst_46 : f32 to vector<16x7xf32>
    %130 = arith.select %116, %128, %129 : vector<16x7xi1>, vector<16x7xf32>
    %cst_47 = arith.constant 1.57079637 : f32
    %131 = vector.broadcast %cst_47 : f32 to vector<16x7xf32>
    %132 = arith.select %114, %131, %130 : vector<16x7xi1>, vector<16x7xf32>
    %133 = arith.mulf %127, %127 : vector<16x7xf32>
    %cst_48 = arith.constant 0.0805374458 : f32
    %134 = vector.broadcast %cst_48 : f32 to vector<16x7xf32>
    %135 = arith.mulf %134, %133 : vector<16x7xf32>
    %cst_49 = arith.constant 0.138776854 : f32
    %136 = vector.broadcast %cst_49 : f32 to vector<16x7xf32>
    %137 = arith.subf %135, %136 : vector<16x7xf32>
    %138 = arith.mulf %137, %133 : vector<16x7xf32>
    %cst_50 = arith.constant 0.199777111 : f32
    %139 = vector.broadcast %cst_50 : f32 to vector<16x7xf32>
    %140 = arith.addf %138, %139 : vector<16x7xf32>
    %141 = arith.mulf %140, %133 : vector<16x7xf32>
    %cst_51 = arith.constant 0.333329499 : f32
    %142 = vector.broadcast %cst_51 : f32 to vector<16x7xf32>
    %143 = arith.subf %141, %142 : vector<16x7xf32>
    %144 = arith.mulf %143, %133 : vector<16x7xf32>
    %145 = arith.mulf %144, %127 : vector<16x7xf32>
    %146 = arith.addf %145, %127 : vector<16x7xf32>
    %147 = arith.addf %132, %146 : vector<16x7xf32>
    %148 = arith.mulf %111, %147 : vector<16x7xf32>
    %cst_52 = arith.constant 0.000000e+00 : f32
    %149 = vector.broadcast %cst_52 : f32 to vector<16x7xf32>
    %150 = arith.cmpf olt, %93, %149 : vector<16x7xf32>
    %cst_53 = arith.constant 0.000000e+00 : f32
    %151 = vector.broadcast %cst_53 : f32 to vector<16x7xf32>
    %152 = arith.cmpf oge, %101, %151 : vector<16x7xf32>
    %cst_54 = arith.constant 3.14159274 : f32
    %cst_55 = arith.constant -3.14159274 : f32
    %153 = vector.broadcast %cst_54 : f32 to vector<16x7xf32>
    %154 = vector.broadcast %cst_55 : f32 to vector<16x7xf32>
    %155 = arith.select %152, %153, %154 : vector<16x7xi1>, vector<16x7xf32>
    %cst_56 = arith.constant 0.000000e+00 : f32
    %156 = vector.broadcast %cst_56 : f32 to vector<16x7xf32>
    %157 = arith.select %150, %155, %156 : vector<16x7xi1>, vector<16x7xf32>
    %158 = arith.addf %148, %157 : vector<16x7xf32>
    %cst_57 = arith.constant 0.000000e+00 : f32
    %159 = vector.broadcast %cst_57 : f32 to vector<16x7xf32>
    %160 = arith.cmpf oeq, %93, %159 : vector<16x7xf32>
    %cst_58 = arith.constant 0.000000e+00 : f32
    %161 = vector.broadcast %cst_58 : f32 to vector<16x7xf32>
    %162 = arith.cmpf ogt, %101, %161 : vector<16x7xf32>
    %cst_59 = arith.constant 0.000000e+00 : f32
    %163 = vector.broadcast %cst_59 : f32 to vector<16x7xf32>
    %164 = arith.cmpf olt, %101, %163 : vector<16x7xf32>
    %cst_60 = arith.constant -1.57079637 : f32
    %cst_61 = arith.constant 0.000000e+00 : f32
    %165 = vector.broadcast %cst_60 : f32 to vector<16x7xf32>
    %166 = vector.broadcast %cst_61 : f32 to vector<16x7xf32>
    %167 = arith.select %164, %165, %166 : vector<16x7xi1>, vector<16x7xf32>
    %cst_62 = arith.constant 1.57079637 : f32
    %168 = vector.broadcast %cst_62 : f32 to vector<16x7xf32>
    %169 = arith.select %162, %168, %167 : vector<16x7xi1>, vector<16x7xf32>
    %170 = arith.select %160, %169, %158 : vector<16x7xi1>, vector<16x7xf32>
    %171 = tpu.iota {dimensions = array<i32: 1>} : vector<1x2xi32>
    %172 = arith.sitofp %171 : vector<1x2xi32> to vector<1x2xf32>
    %cst_63 = arith.constant 1.57079637 : f32
    %173 = vector.broadcast %cst_63 : f32 to vector<1x2xf32>
    %174 = arith.mulf %172, %173 : vector<1x2xf32>
    %175 = vector.broadcast %8 : vector<16x1xf32> to vector<16x2xf32>
    %176 = vector.broadcast %174 : vector<1x2xf32> to vector<16x2xf32>
    %177 = arith.addf %175, %176 : vector<16x2xf32>
    %178 = math.sin %177 : vector<16x2xf32>
    %c0_64 = arith.constant 0 : index
    %c0_65 = arith.constant 0 : index
    %179 = vector.load %arg3[%c0_64, %c0_65] : memref<7x64xf32, #tpu.memory_space<vmem>>, vector<7x64xf32>
    %cst_66 = arith.constant dense<0.000000e+00> : vector<16x64xf32>
    %180 = tpu.matmul %23, %179, %cst_66 {dimension_numbers = #tpu.dot_dimension_numbers<[1], [0], [0], [1], [0, 0, 1, 1], [], []>} : vector<16x7xf32>, vector<7x64xf32>, vector<16x64xf32> -> vector<16x64xf32>
    %c0_67 = arith.constant 0 : index
    %c0_68 = arith.constant 0 : index
    %181 = vector.load %arg4[%c0_67, %c0_68] : memref<7x64xf32, #tpu.memory_space<vmem>>, vector<7x64xf32>
    %cst_69 = arith.constant dense<0.000000e+00> : vector<16x64xf32>
    %182 = tpu.matmul %92, %181, %cst_69 {dimension_numbers = #tpu.dot_dimension_numbers<[1], [0], [0], [1], [0, 0, 1, 1], [], []>} : vector<16x7xf32>, vector<7x64xf32>, vector<16x64xf32> -> vector<16x64xf32>
    %183 = arith.addf %180, %182 : vector<16x64xf32>
    %c0_70 = arith.constant 0 : index
    %c0_71 = arith.constant 0 : index
    %184 = vector.load %arg5[%c0_70, %c0_71] : memref<7x64xf32, #tpu.memory_space<vmem>>, vector<7x64xf32>
    %cst_72 = arith.constant dense<0.000000e+00> : vector<16x64xf32>
    %185 = tpu.matmul %170, %184, %cst_72 {dimension_numbers = #tpu.dot_dimension_numbers<[1], [0], [0], [1], [0, 0, 1, 1], [], []>} : vector<16x7xf32>, vector<7x64xf32>, vector<16x64xf32> -> vector<16x64xf32>
    %186 = arith.addf %183, %185 : vector<16x64xf32>
    %c0_73 = arith.constant 0 : index
    %c0_74 = arith.constant 0 : index
    %187 = vector.load %arg6[%c0_73, %c0_74] : memref<2x64xf32, #tpu.memory_space<vmem>>, vector<2x64xf32>
    %cst_75 = arith.constant dense<0.000000e+00> : vector<16x64xf32>
    %188 = tpu.matmul %178, %187, %cst_75 {dimension_numbers = #tpu.dot_dimension_numbers<[1], [0], [0], [1], [0, 0, 1, 1], [], []>} : vector<16x2xf32>, vector<2x64xf32>, vector<16x64xf32> -> vector<16x64xf32>
    %189 = arith.addf %186, %188 : vector<16x64xf32>
    %c0_76 = arith.constant 0 : index
    %c0_77 = arith.constant 0 : index
    %190 = vector.load %arg7[%c0_76, %c0_77] : memref<16x64xf32, #tpu.memory_space<vmem>>, vector<16x64xf32>
    tpu.vector_store %arg7[%c0_76, %c0_77], %189 {strides = array<i32>} : memref<16x64xf32, #tpu.memory_space<vmem>>, vector<16x64xf32>,
    return
  }
  func.func @transform_0(%arg0: i32) -> (i32, i32) {
    %c0_i32 = arith.constant 0 : i32
    %c0_i32_0 = arith.constant 0 : i32
    return %arg0, %c0_i32 : i32, i32
  }
  func.func @transform_1(%arg0: i32) -> (i32, i32) {
    %c0_i32 = arith.constant 0 : i32
    %c0_i32_0 = arith.constant 0 : i32
    %c0_i32_1 = arith.constant 0 : i32
    return %c0_i32, %c0_i32_0 : i32, i32
  }
  func.func @transform_2(%arg0: i32) -> (i32, i32) {
    %c0_i32 = arith.constant 0 : i32
    %c0_i32_0 = arith.constant 0 : i32
    %c0_i32_1 = arith.constant 0 : i32
    return %c0_i32, %c0_i32_0 : i32, i32
  }
  func.func @transform_3(%arg0: i32) -> (i32, i32) {
    %c0_i32 = arith.constant 0 : i32
    %c0_i32_0 = arith.constant 0 : i32
    %c0_i32_1 = arith.constant 0 : i32
    return %c0_i32, %c0_i32_0 : i32, i32
  }
  func.func @transform_4(%arg0: i32) -> (i32, i32) {
    %c0_i32 = arith.constant 0 : i32
    %c0_i32_0 = arith.constant 0 : i32
    %c0_i32_1 = arith.constant 0 : i32
    return %c0_i32, %c0_i32_0 : i32, i32
  }
  func.func @transform_5(%arg0: i32) -> (i32, i32) {
    %c0_i32 = arith.constant 0 : i32
    %c0_i32_0 = arith.constant 0 : i32
    %c0_i32_1 = arith.constant 0 : i32
    return %c0_i32, %c0_i32_0 : i32, i32
  }
  func.func @transform_6(%arg0: i32) -> (i32, i32) {
    %c0_i32 = arith.constant 0 : i32
    %c0_i32_0 = arith.constant 0 : i32
    return %arg0, %c0_i32 : i32, i32
  }
}

</mosaic_0001>

<llo_original>
// kernel: tpu_custom_call.1
$region0: #{tpu_custom_call.1}
  #allocation0 [shape = 'u32[]', space=smem, size = 0x4, offset = 0x4, fixed_abs, tag = 'smem constant byte address 0x4 - core index']
  #allocation1 [shape = 'u32[144,128]{1,0:T(1,128)}', space=vmem, size = 0x12000, scoped, tag = 'internal scratch']
  %s0 = inlined_call_operand.vmem [shape: f32[64,4], index: 0, kind: input, shape index: {}]
  %s1 = inlined_call_operand.vmem [shape: f32[3,7], index: 1, kind: input, shape index: {}]
  %s2 = inlined_call_operand.vmem [shape: f32[7,64], index: 2, kind: input, shape index: {}]
  %s3 = inlined_call_operand.vmem [shape: f32[7,64], index: 3, kind: input, shape index: {}]
  %s4 = inlined_call_operand.vmem [shape: f32[7,64], index: 4, kind: input, shape index: {}]
  %s5 = inlined_call_operand.vmem [shape: f32[2,64], index: 5, kind: input, shape index: {}]
  %s6 = inlined_call_operand.hbm [shape: f32[64,64], index: 6, kind: output, shape index: {}]
  %s7 = sld [smem:[#allocation0]]
  $region57: #{tpu_custom_call.1} parent=0
    _
  %s9 = ssub.s32 1, %s7
  %s10 = scalar_select 0, %s9, %s7
  $region1: #{tpu_custom_call.1} parent=0
    #allocation2 [shape = 'u8[16384]{0}', space=vmem, size = 0x4000, scoped, tag = 'output window, operand 0']
    #allocation3 [shape = 's32[2]{0}', space=sflag, size = 0x8, scoped, tag = 'scoped memory for tpu_custom_call.1']
    %11 = vsyncpa [#allocation3], 0
    %s12 = scalar_lea.sflag [#allocation3], 1
    %13 = vsyncpa %s12, 0
    loop: start=0, step=1, limit=6
    $region2: #{tpu_custom_call.1} parent=1 // loop_pre_header
      _
    $region3: #{tpu_custom_call.1} parent=1 // loop_header
      %s15 = sphi 0, %s19
      %p16 = scmp.ge.s32.totalorder %s15, 6
      %s25 = sphi 0, %s27
      %s28 = sphi 0, %s25
      %s29 = sphi 0, %s28
      %s45 = sphi 0, %s29
      %s49 = sphi 0, %s49
      %s51 = sphi 0, %s49
      %s52 = sphi 0, %s51
      %s66 = sphi 0, %s52
      %s70 = sphi 0, %s70
      %s72 = sphi 0, %s70
      %s73 = sphi 0, %s72
      %s87 = sphi 0, %s73
      %s91 = sphi 0, %s91
      %s93 = sphi 0, %s91
      %s94 = sphi 0, %s93
      %s108 = sphi 0, %s94
      %s112 = sphi 0, %s112
      %s114 = sphi 0, %s112
      %s115 = sphi 0, %s114
      %s129 = sphi 0, %s115
      %s133 = sphi 0, %s133
      %s135 = sphi 0, %s133
      %s136 = sphi 0, %s135
      %s150 = sphi 0, %s136
      %s156 = sphi 0, %s158
      %s159 = sphi 0, %s156
      %s160 = sphi 0, %s159
      %s176 = sphi 0, %s160
    $region4: #{tpu_custom_call.1} parent=1 // loop_header_branch
      %18 = sbr.rel (%p16) target = $region8
    $region5: #{tpu_custom_call.1} parent=1 // loop_body
      %s20 = ssub.s32 %s15, 1
      %s21 = ssub.s32 %s15, 2
      %s22 = sadd.s32 %s15, 1
      %s23 = ssub.s32 %s15, %s22
      %p24 = scmp.eq.s32.totalorder %s23, 0
      %s26 = sadd.s32 %s25, 1
      %s27 = scalar_select %p24, %s25, %s26
      %p30 = pneg %p24
      %p31 = scmp.eq.s32.totalorder %s15, 3
      %p32 = por %p30, %p31
      %p33 = scmp.ne.s32.totalorder %s25, %s28
      %p34 = scmp.eq.s32.totalorder %s15, 0
      %p35 = por %p33, %p34
      %p36 = scmp.ne.s32.totalorder %s25, %s28
      %p37 = scmp.eq.s32.totalorder %s20, 3
      %p38 = por %p36, %p37
      %p39 = scmp.ne.s32.totalorder %s28, %s29
      %p40 = scmp.eq.s32.totalorder %s20, 0
      %p41 = por %p39, %p40
      %p42 = scmp.ne.s32.totalorder %s28, %s29
      %p43 = scmp.eq.s32.totalorder %s21, 3
      %p44 = por %p42, %p43
      %p46 = scmp.ne.s32.totalorder %s29, %s45
      %p47 = scmp.eq.s32.totalorder %s21, 0
      %p48 = por %p46, %p47
      %s50 = sadd.s32 %s49, 1
      %p53 = scmp.eq.s32.totalorder %s15, 3
      %p54 = scmp.ne.s32.totalorder %s49, %s51
      %p55 = scmp.eq.s32.totalorder %s15, 0
      %p56 = por %p54, %p55
      %p57 = scmp.ne.s32.totalorder %s49, %s51
      %p58 = scmp.eq.s32.totalorder %s20, 3
      %p59 = por %p57, %p58
      %p60 = scmp.ne.s32.totalorder %s51, %s52
      %p61 = scmp.eq.s32.totalorder %s20, 0
      %p62 = por %p60, %p61
      %p63 = scmp.ne.s32.totalorder %s51, %s52
      %p64 = scmp.eq.s32.totalorder %s21, 3
      %p65 = por %p63, %p64
      %p67 = scmp.ne.s32.totalorder %s52, %s66
      %p68 = scmp.eq.s32.totalorder %s21, 0
      %p69 = por %p67, %p68
      %s71 = sadd.s32 %s70, 1
      %p74 = scmp.eq.s32.totalorder %s15, 3
      %p75 = scmp.ne.s32.totalorder %s70, %s72
      %p76 = scmp.eq.s32.totalorder %s15, 0
      %p77 = por %p75, %p76
      %p78 = scmp.ne.s32.totalorder %s70, %s72
      %p79 = scmp.eq.s32.totalorder %s20, 3
      %p80 = por %p78, %p79
      %p81 = scmp.ne.s32.totalorder %s72, %s73
      %p82 = scmp.eq.s32.totalorder %s20, 0
      %p83 = por %p81, %p82
      %p84 = scmp.ne.s32.totalorder %s72, %s73
      %p85 = scmp.eq.s32.totalorder %s21, 3
      %p86 = por %p84, %p85
      %p88 = scmp.ne.s32.totalorder %s73, %s87
      %p89 = scmp.eq.s32.totalorder %s21, 0
      %p90 = por %p88, %p89
      %s92 = sadd.s32 %s91, 1
      %p95 = scmp.eq.s32.totalorder %s15, 3
      %p96 = scmp.ne.s32.totalorder %s91, %s93
      %p97 = scmp.eq.s32.totalorder %s15, 0
      %p98 = por %p96, %p97
      %p99 = scmp.ne.s32.totalorder %s91, %s93
      %p100 = scmp.eq.s32.totalorder %s20, 3
      %p101 = por %p99, %p100
      %p102 = scmp.ne.s32.totalorder %s93, %s94
      %p103 = scmp.eq.s32.totalorder %s20, 0
      %p104 = por %p102, %p103
      %p105 = scmp.ne.s32.totalorder %s93, %s94
      %p106 = scmp.eq.s32.totalorder %s21, 3
      %p107 = por %p105, %p106
      %p109 = scmp.ne.s32.totalorder %s94, %s108
      %p110 = scmp.eq.s32.totalorder %s21, 0
      %p111 = por %p109, %p110
      %s113 = sadd.s32 %s112, 1
      %p116 = scmp.eq.s32.totalorder %s15, 3
      %p117 = scmp.ne.s32.totalorder %s112, %s114
      %p118 = scmp.eq.s32.totalorder %s15, 0
      %p119 = por %p117, %p118
      %p120 = scmp.ne.s32.totalorder %s112, %s114
      %p121 = scmp.eq.s32.totalorder %s20, 3
      %p122 = por %p120, %p121
      %p123 = scmp.ne.s32.totalorder %s114, %s115
      %p124 = scmp.eq.s32.totalorder %s20, 0
      %p125 = por %p123, %p124
      %p126 = scmp.ne.s32.totalorder %s114, %s115
      %p127 = scmp.eq.s32.totalorder %s21, 3
      %p128 = por %p126, %p127
      %p130 = scmp.ne.s32.totalorder %s115, %s129
      %p131 = scmp.eq.s32.totalorder %s21, 0
      %p132 = por %p130, %p131
      %s134 = sadd.s32 %s133, 1
      %p137 = scmp.eq.s32.totalorder %s15, 3
      %p138 = scmp.ne.s32.totalorder %s133, %s135
      %p139 = scmp.eq.s32.totalorder %s15, 0
      %p140 = por %p138, %p139
      %p141 = scmp.ne.s32.totalorder %s133, %s135
      %p142 = scmp.eq.s32.totalorder %s20, 3
      %p143 = por %p141, %p142
      %p144 = scmp.ne.s32.totalorder %s135, %s136
      %p145 = scmp.eq.s32.totalorder %s20, 0
      %p146 = por %p144, %p145
      %p147 = scmp.ne.s32.totalorder %s135, %s136
      %p148 = scmp.eq.s32.totalorder %s21, 3
      %p149 = por %p147, %p148
      %p151 = scmp.ne.s32.totalorder %s136, %s150
      %p152 = scmp.eq.s32.totalorder %s21, 0
      %p153 = por %p151, %p152
      %s154 = ssub.s32 %s15, %s22
      %p155 = scmp.eq.s32.totalorder %s154, 0
      %s157 = sadd.s32 %s156, 1
      %s158 = scalar_select %p155, %s156, %s157
      %p161 = pneg %p155
      %p162 = scmp.eq.s32.totalorder %s15, 3
      %p163 = por %p161, %p162
      %p164 = scmp.ne.s32.totalorder %s156, %s159
      %p165 = scmp.eq.s32.totalorder %s15, 0
      %p166 = por %p164, %p165
      %p167 = scmp.ne.s32.totalorder %s156, %s159
      %p168 = scmp.eq.s32.totalorder %s20, 3
      %p169 = por %p167, %p168
      %p170 = scmp.ne.s32.totalorder %s159, %s160
      %p171 = scmp.eq.s32.totalorder %s20, 0
      %p172 = por %p170, %p171
      %p173 = scmp.ne.s32.totalorder %s159, %s160
      %p174 = scmp.eq.s32.totalorder %s21, 3
      %p175 = por %p173, %p174
      %p177 = scmp.ne.s32.totalorder %s160, %s176
      %p178 = scmp.eq.s32.totalorder %s21, 0
      %p179 = por %p177, %p178
      %p180 = scmp.le.s32.totalorder 1, %s15
      %p181 = scmp.lt.s32.totalorder %s15, 5
      %p182 = pnand %p180, %p181
      %p183 = pneg %p182
      // Predicated region
      $region9: #{tpu_custom_call.1} parent=5 // pred_check
        _
      $region10: #{tpu_custom_call.1} parent=5 // pred_check_branch
        %185 = sbr.rel (%p182) target = $region12
      $region11: #{tpu_custom_call.1} parent=5 // pred_region
        %s186 = ssub.s32 %s15, 1
        // Predicated region
        $region13: #{tpu_custom_call.1} parent=11 // pred_check
          %p187 = pneg %p62
        $region14: #{tpu_custom_call.1} parent=11 // pred_check_branch
          %189 = sbr.rel (%p187) target = $region16
        $region15: #{tpu_custom_call.1} parent=11 // pred_region
          _
        $region16: #{tpu_custom_call.1} parent=11 // pred_fallthru
          _
        // Predicated region
        $region17: #{tpu_custom_call.1} parent=11 // pred_check
          %p190 = pneg %p83
        $region18: #{tpu_custom_call.1} parent=11 // pred_check_branch
          %192 = sbr.rel (%p190) target = $region20
        $region19: #{tpu_custom_call.1} parent=11 // pred_region
          _
        $region20: #{tpu_custom_call.1} parent=11 // pred_fallthru
          _
        // Predicated region
        $region21: #{tpu_custom_call.1} parent=11 // pred_check
          %p193 = pneg %p104
        $region22: #{tpu_custom_call.1} parent=11 // pred_check_branch
          %195 = sbr.rel (%p193) target = $region24
        $region23: #{tpu_custom_call.1} parent=11 // pred_region
          _
        $region24: #{tpu_custom_call.1} parent=11 // pred_fallthru
          _
        // Predicated region
        $region25: #{tpu_custom_call.1} parent=11 // pred_check
          %p196 = pneg %p125
        $region26: #{tpu_custom_call.1} parent=11 // pred_check_branch
          %198 = sbr.rel (%p196) target = $region28
        $region27: #{tpu_custom_call.1} parent=11 // pred_region
          _
        $region28: #{tpu_custom_call.1} parent=11 // pred_fallthru
          _
        // Predicated region
        $region29: #{tpu_custom_call.1} parent=11 // pred_check
          %p199 = pneg %p146
        $region30: #{tpu_custom_call.1} parent=11 // pred_check_branch
          %201 = sbr.rel (%p199) target = $region32
        $region31: #{tpu_custom_call.1} parent=11 // pred_region
          _
        $region32: #{tpu_custom_call.1} parent=11 // pred_fallthru
          _
      $region12: #{tpu_custom_call.1} parent=5 // pred_fallthru
        _
      %p202 = scmp.lt.s32.totalorder %s15, 4
      // Predicated region
      $region33: #{tpu_custom_call.1} parent=5 // pred_check
        %p203 = pneg %p202
      $region34: #{tpu_custom_call.1} parent=5 // pred_check_branch
        %205 = sbr.rel (%p203) target = $region36
      $region35: #{tpu_custom_call.1} parent=5 // pred_region
        // Predicated region
        $region37: #{tpu_custom_call.1} parent=35 // pred_check
          %p206 = pneg %p35
        $region38: #{tpu_custom_call.1} parent=35 // pred_check_branch
          %208 = sbr.rel (%p206) target = $region40
        $region39: #{tpu_custom_call.1} parent=35 // pred_region
          %s209 = smul.u32 2, %s15
          %p210 = scmp.lt.s32.totalorder %s209, 7
          %s211 = scalar_select %p210, %s209, 7
          %s212 = smul.addr %s211, 8
          %s213 = scalar_lea.vmem %s0, %s212
          %s214 = smul.u32 2, %s15
        $region40: #{tpu_custom_call.1} parent=35 // pred_fallthru
          _
      $region36: #{tpu_custom_call.1} parent=5 // pred_fallthru
        _
      %p215 = scmp.le.s32.totalorder 1, %s15
      %p216 = scmp.lt.s32.totalorder %s15, 5
      %p217 = pnand %p215, %p216
      %p218 = pneg %p217
      // Predicated region
      $region41: #{tpu_custom_call.1} parent=5 // pred_check
        _
      $region42: #{tpu_custom_call.1} parent=5 // pred_check_branch
        %220 = sbr.rel (%p217) target = $region44
      $region43: #{tpu_custom_call.1} parent=5 // pred_region
        %s221 = ssub.s32 %s15, 1
        %s222 = smul.u32 2, %s20
        %p223 = scmp.lt.s32.totalorder %s222, 7
        %s224 = scalar_select %p223, %s222, 7
        %s225 = smul.addr %s224, 8
        %s226 = scalar_lea.vmem %s0, %s225
        %p227 = pneg %p41
        %p228 = pneg %p38
        %p229 = pneg %p62
        %p230 = pneg %p59
        %p231 = pneg %p83
        %p232 = pneg %p80
        %p233 = pneg %p104
        %p234 = pneg %p101
        %p235 = pneg %p125
        %p236 = pneg %p122
        %p237 = pneg %p146
        %p238 = pneg %p143
        %p239 = pneg %p172
        %p240 = pneg %p169
        %s241 = sand.u32 %s159, 1
        %s242 = scalar_lea.sflag [#allocation3], %s241
        %s243 = sand.u32 %s159, 1
        %s244 = smul.addr %s243, 16
        %s245 = scalar_lea.vmem [#allocation2], %s244
        %s246 = smul.u32 2, %s20
        %p247 = scmp.lt.s32.totalorder %s246, 7
        %s248 = scalar_select %p247, %s246, 7
        %s249 = smul.addr %s248, 8
        %s250 = scalar_lea.vmem %s0, %s249
        %s251 = smul.u32 2, %s20
        %s252 = smul.u32 2, %s20
        %v253 = vld [vmem:[%s250] sm:$0xff]
        %v254 = vld [vmem:[%s250 + $0x8] sm:$0xff]
        %v255 = vld [vmem:[%s1] sm:$0x7]
        %257 = vset.pattern.permute.xlu0 0
        %258 = vperm.xlu0 %257, %v253
        %v259 = vpop.permute.xlu0 %258
        %262 = vset.pattern.permute.xlu0 0
        %263 = vperm.xlu0 %262, %v254
        %v264 = vpop.permute.xlu0 %263
        %v266 = vlaneseq
        %v267 = vshrl.u32 %v266, 7
        %v268 = vsub.s32 0, %v267
        %v269 = vrot.slane %v255, %v268
        %v270 = vsub.f32 %v259, %v269
        %v271 = vsub.f32 %v264, %v269
        %272 = vset.pattern.permute.xlu0 1
        %273 = vperm.xlu0 %272, %v253
        %v274 = vpop.permute.xlu0 %273
        %276 = vset.pattern.permute.xlu0 1
        %277 = vperm.xlu0 %276, %v254
        %v278 = vpop.permute.xlu0 %277
        %v280 = vlaneseq
        %v281 = vshrl.u32 %v280, 7
        %v282 = vsub.s32 1, %v281
        %v283 = vrot.slane %v255, %v282
        %v284 = vsub.f32 %v274, %v283
        %v285 = vsub.f32 %v278, %v283
        %286 = vset.pattern.permute.xlu0 2
        %287 = vperm.xlu0 %286, %v253
        %v288 = vpop.permute.xlu0 %287
        %290 = vset.pattern.permute.xlu0 2
        %291 = vperm.xlu0 %290, %v254
        %v292 = vpop.permute.xlu0 %291
        %v294 = vlaneseq
        %v295 = vshrl.u32 %v294, 7
        %v296 = vsub.s32 2, %v295
        %v297 = vrot.slane %v255, %v296
        %v298 = vsub.f32 %v288, %v297
        %v299 = vsub.f32 %v292, %v297
        %v300 = vmul.f32 %v270, %v270
        %v301 = vmul.f32 %v271, %v271
        %v302 = vmul.f32 %v284, %v284
        %v303 = vmul.f32 %v285, %v285
        %v304 = vadd.f32 %v300, %v302
        %v305 = vadd.f32 %v301, %v303
        %v306 = vmul.f32 %v298, %v298
        %v307 = vmul.f32 %v299, %v299
        %v308 = vadd.f32 %v304, %v306
        %v309 = vadd.f32 %v305, %v307
        %v310 = vrsqrt.pop %v308
        %v311 = vmul.f32 %v308, %v310
        %vm312 = vcmp.eq.f32.partialorder %v308, inf
        %v313 = vsel %vm312, %v308, %v311
        %vm314 = vcmp.eq.f32.partialorder %v308, 0.0
        %v315 = vand.u32 %v308, 2147483648
        %v316 = vsel %vm314, %v315, %v313
        %v317 = vrsqrt.pop %v309
        %v318 = vmul.f32 %v309, %v317
        %vm319 = vcmp.eq.f32.partialorder %v309, inf
        %v320 = vsel %vm319, %v309, %v318
        %vm321 = vcmp.eq.f32.partialorder %v309, 0.0
        %v322 = vand.u32 %v309, 2147483648
        %v323 = vsel %vm321, %v322, %v320
        %vm324 = vcmp.eq.f32.partialorder %v270, 0.0
        %vm325 = vcmp.eq.f32.partialorder %v271, 0.0
        %v326 = vsel %vm324, 1.0, %v270
        %v327 = vsel %vm325, 1.0, %v271
        %v328 = vrcp.pop %v326
        %v329 = vmul.f32 %v284, %v328
        %v330 = vrcp.pop %v327
        %v331 = vmul.f32 %v285, %v330
        %vm332 = vcmp.lt.f32.partialorder %v329, 0.0
        %vm333 = vcmp.lt.f32.partialorder %v331, 0.0
        %v334 = vsel %vm332, -1.0, 1.0
        %v335 = vsel %vm333, -1.0, 1.0
        %v336 = vand.u32 2147483647, %v329
        %v337 = vand.u32 2147483647, %v331
        %vm338 = vcmp.gt.f32.partialorder %v336, 2.4142137
        %vm339 = vcmp.gt.f32.partialorder %v337, 2.4142137
        %vm340 = vcmp.gt.f32.partialorder %v336, 0.41421357
        %vm341 = vcmp.gt.f32.partialorder %v337, 0.41421357
        %v342 = vmax.f32 %v336, 1e-30
        %v343 = vmax.f32 %v337, 1e-30
        %v344 = vrcp.pop %v342
        %v345 = vmul.f32 -1.0, %v344
        %v346 = vrcp.pop %v343
        %v347 = vmul.f32 -1.0, %v346
        %v348 = vsub.f32 %v336, 1.0
        %v349 = vsub.f32 %v337, 1.0
        %v350 = vadd.f32 %v336, 1.0
        %v351 = vadd.f32 %v337, 1.0
        %v352 = vrcp.pop %v350
        %v353 = vmul.f32 %v348, %v352
        %v354 = vrcp.pop %v351
        %v355 = vmul.f32 %v349, %v354
        %v356 = vsel %vm340, %v353, %v336
        %v357 = vsel %vm341, %v355, %v337
        %v358 = vsel %vm338, %v345, %v356
        %v359 = vsel %vm339, %v347, %v357
        %v360 = vsel %vm340, 0.7853982, 0.0
        %v361 = vsel %vm341, 0.7853982, 0.0
        %v362 = vsel %vm338, 1.5707964, %v360
        %v363 = vsel %vm339, 1.5707964, %v361
        %v364 = vmul.f32 %v358, %v358
        %v365 = vmul.f32 %v359, %v359
        %v366 = vmul.f32 %v364, 0.080537446
        %v367 = vmul.f32 %v365, 0.080537446
        %v368 = vsub.f32 %v366, 0.13877685
        %v369 = vsub.f32 %v367, 0.13877685
        %v370 = vmul.f32 %v368, %v364
        %v371 = vmul.f32 %v369, %v365
        %v372 = vadd.f32 %v370, 0.19977711
        %v373 = vadd.f32 %v371, 0.19977711
        %v374 = vmul.f32 %v372, %v364
        %v375 = vmul.f32 %v373, %v365
        %v376 = vsub.f32 %v374, 0.3333295
        %v377 = vsub.f32 %v375, 0.3333295
        %v378 = vmul.f32 %v376, %v364
        %v379 = vmul.f32 %v377, %v365
        %v380 = vmul.f32 %v378, %v358
        %v381 = vmul.f32 %v379, %v359
        %v382 = vadd.f32 %v380, %v358
        %v383 = vadd.f32 %v381, %v359
        %v384 = vadd.f32 %v362, %v382
        %v385 = vadd.f32 %v363, %v383
        %v386 = vmul.f32 %v334, %v384
        %v387 = vmul.f32 %v335, %v385
        %vm388 = vcmp.lt.f32.partialorder %v270, 0.0
        %vm389 = vcmp.lt.f32.partialorder %v271, 0.0
        %vm390 = vcmp.ge.f32.partialorder %v284, 0.0
        %vm391 = vcmp.ge.f32.partialorder %v285, 0.0
        %v392 = vsel %vm390, 3.1415927, -3.1415927
        %v393 = vsel %vm391, 3.1415927, -3.1415927
        %v394 = vsel %vm388, %v392, 0.0
        %v395 = vsel %vm389, %v393, 0.0
        %v396 = vadd.f32 %v386, %v394
        %v397 = vadd.f32 %v387, %v395
        %vm398 = vcmp.gt.f32.partialorder %v284, 0.0
        %vm399 = vcmp.gt.f32.partialorder %v285, 0.0
        %vm400 = vcmp.lt.f32.partialorder %v284, 0.0
        %vm401 = vcmp.lt.f32.partialorder %v285, 0.0
        %v402 = vsel %vm400, -1.5707964, 0.0
        %v403 = vsel %vm401, -1.5707964, 0.0
        %v404 = vsel %vm398, 1.5707964, %v402
        %v405 = vsel %vm399, 1.5707964, %v403
        %v406 = vsel %vm324, %v404, %v396
        %v407 = vsel %vm325, %v405, %v397
        %v408 = vrcp.pop %v316
        %v409 = vmul.f32 %v298, %v408
        %v410 = vrcp.pop %v323
        %v411 = vmul.f32 %v299, %v410
        %v412 = vsub.f32 1.0, %v409
        %v413 = vsub.f32 1.0, %v411
        %v414 = vadd.f32 %v409, 1.0
        %v415 = vadd.f32 %v411, 1.0
        %v416 = vmul.f32 %v412, %v414
        %v417 = vmul.f32 %v413, %v415
        %v418 = vmax.f32 %v416, 0.0
        %v419 = vmax.f32 %v417, 0.0
        %v420 = vrsqrt.pop %v418
        %v421 = vmul.f32 %v418, %v420
        %vm422 = vcmp.eq.f32.partialorder %v418, inf
        %v423 = vsel %vm422, %v418, %v421
        %vm424 = vcmp.eq.f32.partialorder %v418, 0.0
        %v425 = vand.u32 %v418, 2147483648
        %v426 = vsel %vm424, %v425, %v423
        %v427 = vrsqrt.pop %v419
        %v428 = vmul.f32 %v419, %v427
        %vm429 = vcmp.eq.f32.partialorder %v419, inf
        %v430 = vsel %vm429, %v419, %v428
        %vm431 = vcmp.eq.f32.partialorder %v419, 0.0
        %v432 = vand.u32 %v419, 2147483648
        %v433 = vsel %vm431, %v432, %v430
        %vm434 = vcmp.eq.f32.partialorder %v409, 0.0
        %vm435 = vcmp.eq.f32.partialorder %v411, 0.0
        %v436 = vsel %vm434, 1.0, %v409
        %v437 = vsel %vm435, 1.0, %v411
        %v438 = vrcp.pop %v436
        %v439 = vmul.f32 %v426, %v438
        %v440 = vrcp.pop %v437
        %v441 = vmul.f32 %v433, %v440
        %vm442 = vcmp.lt.f32.partialorder %v439, 0.0
        %vm443 = vcmp.lt.f32.partialorder %v441, 0.0
        %v444 = vsel %vm442, -1.0, 1.0
        %v445 = vsel %vm443, -1.0, 1.0
        %v446 = vand.u32 2147483647, %v439
        %v447 = vand.u32 2147483647, %v441
        %vm448 = vcmp.gt.f32.partialorder %v446, 2.4142137
        %vm449 = vcmp.gt.f32.partialorder %v447, 2.4142137
        %vm450 = vcmp.gt.f32.partialorder %v446, 0.41421357
        %vm451 = vcmp.gt.f32.partialorder %v447, 0.41421357
        %v452 = vmax.f32 %v446, 1e-30
        %v453 = vmax.f32 %v447, 1e-30
        %v454 = vrcp.pop %v452
        %v455 = vmul.f32 -1.0, %v454
        %v456 = vrcp.pop %v453
        %v457 = vmul.f32 -1.0, %v456
        %v458 = vsub.f32 %v446, 1.0
        %v459 = vsub.f32 %v447, 1.0
        %v460 = vadd.f32 %v446, 1.0
        %v461 = vadd.f32 %v447, 1.0
        %v462 = vrcp.pop %v460
        %v463 = vmul.f32 %v458, %v462
        %v464 = vrcp.pop %v461
        %v465 = vmul.f32 %v459, %v464
        %v466 = vsel %vm450, %v463, %v446
        %v467 = vsel %vm451, %v465, %v447
        %v468 = vsel %vm448, %v455, %v466
        %v469 = vsel %vm449, %v457, %v467
        %v470 = vsel %vm450, 0.7853982, 0.0
        %v471 = vsel %vm451, 0.7853982, 0.0
        %v472 = vsel %vm448, 1.5707964, %v470
        %v473 = vsel %vm449, 1.5707964, %v471
        %v474 = vmul.f32 %v468, %v468
        %v475 = vmul.f32 %v469, %v469
        %v476 = vmul.f32 %v474, 0.080537446
        %v477 = vmul.f32 %v475, 0.080537446
        %v478 = vsub.f32 %v476, 0.13877685
        %v479 = vsub.f32 %v477, 0.13877685
        %v480 = vmul.f32 %v478, %v474
        %v481 = vmul.f32 %v479, %v475
        %v482 = vadd.f32 %v480, 0.19977711
        %v483 = vadd.f32 %v481, 0.19977711
        %v484 = vmul.f32 %v482, %v474
        %v485 = vmul.f32 %v483, %v475
        %v486 = vsub.f32 %v484, 0.3333295
        %v487 = vsub.f32 %v485, 0.3333295
        %v488 = vmul.f32 %v486, %v474
        %v489 = vmul.f32 %v487, %v475
        %v490 = vmul.f32 %v488, %v468
        %v491 = vmul.f32 %v489, %v469
        %v492 = vadd.f32 %v490, %v468
        %v493 = vadd.f32 %v491, %v469
        %v494 = vadd.f32 %v472, %v492
        %v495 = vadd.f32 %v473, %v493
        %v496 = vmul.f32 %v444, %v494
        %v497 = vmul.f32 %v445, %v495
        %vm498 = vcmp.lt.f32.partialorder %v409, 0.0
        %vm499 = vcmp.lt.f32.partialorder %v411, 0.0
        %vm500 = vcmp.ge.f32.partialorder %v426, 0.0
        %vm501 = vcmp.ge.f32.partialorder %v433, 0.0
        %v502 = vsel %vm500, 3.1415927, -3.1415927
        %v503 = vsel %vm501, 3.1415927, -3.1415927
        %v504 = vsel %vm498, %v502, 0.0
        %v505 = vsel %vm499, %v503, 0.0
        %v506 = vadd.f32 %v496, %v504
        %v507 = vadd.f32 %v497, %v505
        %vm508 = vcmp.gt.f32.partialorder %v426, 0.0
        %vm509 = vcmp.gt.f32.partialorder %v433, 0.0
        %vm510 = vcmp.lt.f32.partialorder %v426, 0.0
        %vm511 = vcmp.lt.f32.partialorder %v433, 0.0
        %v512 = vsel %vm510, -1.5707964, 0.0
        %v513 = vsel %vm511, -1.5707964, 0.0
        %v514 = vsel %vm508, 1.5707964, %v512
        %v515 = vsel %vm509, 1.5707964, %v513
        %v516 = vsel %vm434, %v514, %v506
        %v517 = vsel %vm435, %v515, %v507
        %v518 = vlaneseq
        %v519 = vand.u32 %v518, 127
        %v520 = vcvt.s32.f32 %v519
        %v521 = vmul.f32 %v520, 1.5707964
        %522 = vset.pattern.permute.xlu0 3
        %523 = vperm.xlu0 %522, %v253
        %v524 = vpop.permute.xlu0 %523
        %526 = vset.pattern.permute.xlu0 3
        %527 = vperm.xlu0 %526, %v254
        %v528 = vpop.permute.xlu0 %527
        %v530 = vadd.f32 %v524, %v521
        %v531 = vadd.f32 %v528, %v521
        %v532 = vand.u32 2147483647, %v530
        %vm533 = vcmp.le.f32.partialorder %v532, 0.7853982
        %vm534 = vcmp.lt.s32.totalorder %v530, 0
        %v535 = vand.u32 %v530, 2139095040
        %v536 = vshrl.u32 %v535, 23
        %v537 = vsub.s32 %v536, 127
        %v538 = vand.u32 2147483647, %v530
        %v539 = vand.u32 %v538, 8388607
        %v540 = vor.u32 %v539, 8388608
        %v541 = vsub.s32 0, %v540
        %v542 = vadd.s32 %v537, 1
        %vm543 = vcmp.gt.s32.totalorder %v542, 0
        %v544 = vsel %vm543, %v542, 0
        %v545 = vshrl.u32 %v544, 5
        %v546 = vand.u32 %v544, 31
        %v547 = vsub.s32 32, %v546
        %v548 = vshrl.u32 683565275, %v547
        %v549 = vshll.u32 683565275, %v546
        %v550 = vshrl.u32 2475754826, %v547
        %v551 = vor.u32 %v549, %v550
        %v552 = vshll.u32 2475754826, %v546
        %v553 = vshrl.u32 2131351028, %v547
        %v554 = vor.u32 %v552, %v553
        %v555 = vshll.u32 2131351028, %v546
        %v556 = vshrl.u32 2102212464, %v547
        %v557 = vor.u32 %v555, %v556
        %v558 = vshll.u32 2102212464, %v546
        %v559 = vshrl.u32 920167782, %v547
        %v560 = vor.u32 %v558, %v559
        %v561 = vshll.u32 920167782, %v546
        %v562 = vshrl.u32 1326507024, %v547
        %v563 = vor.u32 %v561, %v562
        %vm564 = vcmp.lt.s32.totalorder %v545, 1
        %vm565 = vcmp.lt.s32.totalorder %v545, 2
        %vm566 = vcmp.lt.s32.totalorder %v545, 3
        %vm567 = vcmp.lt.s32.totalorder %v545, 4
        %v568 = vsel %vm564, %v548, %v551
        %v569 = vsel %vm567, %v557, 2102212464
        %v570 = vsel %vm566, %v554, %v569
        %v571 = vsel %vm565, %v568, %v570
        %v572 = vsel %vm564, %v551, %v554
        %v573 = vsel %vm567, %v560, 920167782
        %v574 = vsel %vm566, %v557, %v573
        %v575 = vsel %vm565, %v572, %v574
        %v576 = vsel %vm564, %v554, %v557
        %v577 = vsel %vm567, %v563, 1326507024
        %v578 = vsel %vm566, %v560, %v577
        %v579 = vsel %vm565, %v576, %v578
        %v580 = vshll.u32 %v540, 8
        %v581 = vmul.u32.u64.compose %v580, %v579
        %v582 = vextract.low.u32 %v581
        %v583 = vextract.high.u32 %v581
        %v584 = vmul.u32.u64.compose %v580, %v575
        %v585 = vextract.low.u32 %v584
        %v586 = vextract.high.u32 %v584
        %v587 = vmul.u32 %v580, %v571
        %v588 = vadd.s32 %v583, %v585
        %vm589 = vc.u32 %v583, %v585
        %v590 = vadd.s32 %v586, 1
        %v591 = vsel %vm589, %v590, %v586
        %v592 = vadd.s32 %v587, %v591
        %v593 = vadd.s32 %v592, 536870912
        %v594 = vshrl.u32 %v593, 30
        %v595 = vshll.u32 %v594, 30
        %v596 = vsub.s32 %v592, %v595
        %vm597 = vcmp.lt.s32.totalorder %v596, 0
        %v598 = vsub.s32 0, %v596
        %v599 = vsel %vm597, %v598, %v596
        %v600 = vclz %v599
        %v601 = vsub.s32 %v600, 2
        %vm602 = vcmp.gt.s32.totalorder 0, %v601
        %v603 = vsel %vm602, 0, %v601
        %v604 = vsub.s32 32, %v603
        %v605 = vshll.u32 %v596, %v603
        %v606 = vshrl.u32 %v588, %v604
        %v607 = vor.u32 %v605, %v606
        %v608 = vsub.s32 4294967266, %v603
        %v609 = vadd.s32 %v608, 127
        %v610 = vshll.u32 %v609, 23
        %v611 = vor.u32 4788187, %v610
        %v612 = vand.u32 2147483647, %v611
        %v614 = vcvt.s32.f32 %v607
        %v615 = vmul.f32 %v614, %v612
        %v616 = vxor.u32 %v615, 2147483648
        %v617 = vsel %vm534, %v616, %v615
        %v618 = vsub.s32 4, %v594
        %v619 = vsel %vm534, %v618, %v594
        %v620 = vsel %vm533, %v530, %v617
        %v621 = vsel %vm533, 0, %v619
        %v622 = vcosq.f32.pop %v620
        %v623 = vsinq.f32.pop %v620
        %vm624 = vweird.f32 %v530
        %v625 = vadd.s32 %v621, 3
        %v626 = vand.u32 %v625, 3
        %vm627 = vcmp.lt.s32.totalorder %v626, 2
        %vm628 = vcmp.eq.s32.totalorder %v626, 0
        %v629 = vxor.u32 %v623, 2147483648
        %v630 = vsel %vm628, %v622, %v629
        %vm631 = vcmp.eq.s32.totalorder %v626, 2
        %v632 = vxor.u32 %v622, 2147483648
        %v633 = vsel %vm631, %v632, %v623
        %v634 = vsel %vm627, %v630, %v633
        %v635 = vsel %vm624, nan, %v634
        %v636 = vand.u32 2147483647, %v531
        %vm637 = vcmp.le.f32.partialorder %v636, 0.7853982
        %vm638 = vcmp.lt.s32.totalorder %v531, 0
        %v639 = vand.u32 %v531, 2139095040
        %v640 = vshrl.u32 %v639, 23
        %v641 = vsub.s32 %v640, 127
        %v642 = vand.u32 2147483647, %v531
        %v643 = vand.u32 %v642, 8388607
        %v644 = vor.u32 %v643, 8388608
        %v645 = vsub.s32 0, %v644
        %v646 = vadd.s32 %v641, 1
        %vm647 = vcmp.gt.s32.totalorder %v646, 0
        %v648 = vsel %vm647, %v646, 0
        %v649 = vshrl.u32 %v648, 5
        %v650 = vand.u32 %v648, 31
        %v651 = vsub.s32 32, %v650
        %v652 = vshrl.u32 683565275, %v651
        %v653 = vshll.u32 683565275, %v650
        %v654 = vshrl.u32 2475754826, %v651
        %v655 = vor.u32 %v653, %v654
        %v656 = vshll.u32 2475754826, %v650
        %v657 = vshrl.u32 2131351028, %v651
        %v658 = vor.u32 %v656, %v657
        %v659 = vshll.u32 2131351028, %v650
        %v660 = vshrl.u32 2102212464, %v651
        %v661 = vor.u32 %v659, %v660
        %v662 = vshll.u32 2102212464, %v650
        %v663 = vshrl.u32 920167782, %v651
        %v664 = vor.u32 %v662, %v663
        %v665 = vshll.u32 920167782, %v650
        %v666 = vshrl.u32 1326507024, %v651
        %v667 = vor.u32 %v665, %v666
        %vm668 = vcmp.lt.s32.totalorder %v649, 1
        %vm669 = vcmp.lt.s32.totalorder %v649, 2
        %vm670 = vcmp.lt.s32.totalorder %v649, 3
        %vm671 = vcmp.lt.s32.totalorder %v649, 4
        %v672 = vsel %vm668, %v652, %v655
        %v673 = vsel %vm671, %v661, 2102212464
        %v674 = vsel %vm670, %v658, %v673
        %v675 = vsel %vm669, %v672, %v674
        %v676 = vsel %vm668, %v655, %v658
        %v677 = vsel %vm671, %v664, 920167782
        %v678 = vsel %vm670, %v661, %v677
        %v679 = vsel %vm669, %v676, %v678
        %v680 = vsel %vm668, %v658, %v661
        %v681 = vsel %vm671, %v667, 1326507024
        %v682 = vsel %vm670, %v664, %v681
        %v683 = vsel %vm669, %v680, %v682
        %v684 = vshll.u32 %v644, 8
        %v685 = vmul.u32.u64.compose %v684, %v683
        %v686 = vextract.low.u32 %v685
        %v687 = vextract.high.u32 %v685
        %v688 = vmul.u32.u64.compose %v684, %v679
        %v689 = vextract.low.u32 %v688
        %v690 = vextract.high.u32 %v688
        %v691 = vmul.u32 %v684, %v675
        %v692 = vadd.s32 %v687, %v689
        %vm693 = vc.u32 %v687, %v689
        %v694 = vadd.s32 %v690, 1
        %v695 = vsel %vm693, %v694, %v690
        %v696 = vadd.s32 %v691, %v695
        %v697 = vadd.s32 %v696, 536870912
        %v698 = vshrl.u32 %v697, 30
        %v699 = vshll.u32 %v698, 30
        %v700 = vsub.s32 %v696, %v699
        %vm701 = vcmp.lt.s32.totalorder %v700, 0
        %v702 = vsub.s32 0, %v700
        %v703 = vsel %vm701, %v702, %v700
        %v704 = vclz %v703
        %v705 = vsub.s32 %v704, 2
        %vm706 = vcmp.gt.s32.totalorder 0, %v705
        %v707 = vsel %vm706, 0, %v705
        %v708 = vsub.s32 32, %v707
        %v709 = vshll.u32 %v700, %v707
        %v710 = vshrl.u32 %v692, %v708
        %v711 = vor.u32 %v709, %v710
        %v712 = vsub.s32 4294967266, %v707
        %v713 = vadd.s32 %v712, 127
        %v714 = vshll.u32 %v713, 23
        %v715 = vor.u32 4788187, %v714
        %v716 = vand.u32 2147483647, %v715
        %v718 = vcvt.s32.f32 %v711
        %v719 = vmul.f32 %v718, %v716
        %v720 = vxor.u32 %v719, 2147483648
        %v721 = vsel %vm638, %v720, %v719
        %v722 = vsub.s32 4, %v698
        %v723 = vsel %vm638, %v722, %v698
        %v724 = vsel %vm637, %v531, %v721
        %v725 = vsel %vm637, 0, %v723
        %v726 = vcosq.f32.pop %v724
        %v727 = vsinq.f32.pop %v724
        %vm728 = vweird.f32 %v531
        %v729 = vadd.s32 %v725, 3
        %v730 = vand.u32 %v729, 3
        %vm731 = vcmp.lt.s32.totalorder %v730, 2
        %vm732 = vcmp.eq.s32.totalorder %v730, 0
        %v733 = vxor.u32 %v727, 2147483648
        %v734 = vsel %vm732, %v726, %v733
        %vm735 = vcmp.eq.s32.totalorder %v730, 2
        %v736 = vxor.u32 %v726, 2147483648
        %v737 = vsel %vm735, %v736, %v727
        %v738 = vsel %vm731, %v734, %v737
        %v739 = vsel %vm728, nan, %v738
        %v740 = vld [vmem:[%s2] sm:$0x7f]
        %v741 = vld [vmem:[%s3] sm:$0x7f]
        %vm742 = vcmask 56320
        %v744 = vsel %vm742, %v406, 0
        %v747 = vsel %vm742, %v407, 0
        %vm749 = vcmask 1046528
        %v751 = vsel %vm749, %v741, 0
        %753 = vmatprep.subr.mxu0 0.0
        %754 = vmatpush1.msra.mxu0 0.0
        %755 = vmatprep.subr.mxu0 0.0
        %756 = vmatpush1.msra.mxu0 0.0
        %757 = vmatprep.subr.mxu0 0.0
        %758 = vmatpush1.msra.mxu0 0.0
        %759 = vmatprep.subr.mxu0 0.0
        %760 = vmatpush1.msra.mxu0 0.0
        %761 = vmatprep.subr.mxu0 0.0
        %762 = vmatpush1.msra.mxu0 0.0
        %763 = vmatprep.subr.mxu0 0.0
        %764 = vmatpush1.msra.mxu0 0.0
        %765 = vmatprep.subr.mxu0 0.0
        %766 = vmatpush1.msra.mxu0 0.0
        %767 = vmatprep.subr.mxu0 0.0
        %768 = vmatpush1.msra.mxu0 0.0
        %769 = vmatprep.subr.mxu0 0.0
        %770 = vmatpush1.msra.mxu0 0.0
        %771 = vmatprep.subr.mxu0 0.0
        %772 = vmatpush1.msra.mxu0 0.0
        %773 = vmatprep.subr.mxu0 0.0
        %774 = vmatpush1.msra.mxu0 0.0
        %775 = vmatprep.subr.mxu0 0.0
        %776 = vmatpush1.msra.mxu0 0.0
        %777 = vmatprep.subr.mxu0 0.0
        %778 = vmatpush1.msra.mxu0 0.0
        %779 = vmatprep.subr.mxu0 0.0
        %780 = vmatpush1.msra.mxu0 0.0
        %781 = vmatprep.subr.mxu0 0.0
        %782 = vmatpush1.msra.mxu0 0.0
        %783 = vmatprep.subr.mxu0 0.0
        %784 = vmatpush1.msra.mxu0 %v751
        %785 = vmatprep.subr.mxu0 0.0
        %786 = vmatpush2.msra.mxu0 0.0
        %787 = vmatprep.subr.mxu0 0.0
        %788 = vmatpush2.msra.mxu0 0.0
        %789 = vmatprep.subr.mxu0 0.0
        %790 = vmatpush2.msra.mxu0 0.0
        %791 = vmatprep.subr.mxu0 0.0
        %792 = vmatpush2.msra.mxu0 0.0
        %793 = vmatprep.subr.mxu0 0.0
        %794 = vmatpush2.msra.mxu0 0.0
        %795 = vmatprep.subr.mxu0 0.0
        %796 = vmatpush2.msra.mxu0 0.0
        %797 = vmatprep.subr.mxu0 0.0
        %798 = vmatpush2.msra.mxu0 0.0
        %799 = vmatprep.subr.mxu0 0.0
        %800 = vmatpush2.msra.mxu0 0.0
        %801 = vmatprep.subr.mxu0 0.0
        %802 = vmatpush2.msra.mxu0 0.0
        %803 = vmatprep.subr.mxu0 0.0
        %804 = vmatpush2.msra.mxu0 0.0
        %805 = vmatprep.subr.mxu0 0.0
        %806 = vmatpush2.msra.mxu0 0.0
        %807 = vmatprep.subr.mxu0 0.0
        %808 = vmatpush2.msra.mxu0 0.0
        %809 = vmatprep.subr.mxu0 0.0
        %810 = vmatpush2.msra.mxu0 0.0
        %811 = vmatprep.subr.mxu0 0.0
        %812 = vmatpush2.msra.mxu0 0.0
        %813 = vmatprep.subr.mxu0 0.0
        %814 = vmatpush2.msra.mxu0 0.0
        %815 = vmatprep.subr.mxu0 0.0
        %816 = vmatpush2.msra.mxu0 0.0
        %817 = vmatprep.mubr.f32.mxu0 0.0
        %818 = vmatmul.mubr.f32.gmra.mxu0 %v744
        %v819 = vpop.f32.mrf.mxu0
        %v820 = vadd.f32 0.0, %v819
        %v821 = vpop.f32.mrf.mxu0
        %822 = vmatprep.mubr.f32.mxu0 0.0
        %823 = vmatmul.mubr.f32.gmra.mxu0 %v747
        %v824 = vpop.f32.mrf.mxu0
        %v825 = vadd.f32 0.0, %v824
        %v826 = vpop.f32.mrf.mxu0
        %827 = vdwg.mxu0
        %v829 = vsel %vm742, %v316, 0
        %v832 = vsel %vm742, %v323, 0
        %v835 = vsel %vm749, %v740, 0
        %837 = vmatprep.subr.mxu0 0.0
        %838 = vmatpush1.msra.mxu0 0.0
        %839 = vmatprep.subr.mxu0 0.0
        %840 = vmatpush1.msra.mxu0 0.0
        %841 = vmatprep.subr.mxu0 0.0
        %842 = vmatpush1.msra.mxu0 0.0
        %843 = vmatprep.subr.mxu0 0.0
        %844 = vmatpush1.msra.mxu0 0.0
        %845 = vmatprep.subr.mxu0 0.0
        %846 = vmatpush1.msra.mxu0 0.0
        %847 = vmatprep.subr.mxu0 0.0
        %848 = vmatpush1.msra.mxu0 0.0
        %849 = vmatprep.subr.mxu0 0.0
        %850 = vmatpush1.msra.mxu0 0.0
        %851 = vmatprep.subr.mxu0 0.0
        %852 = vmatpush1.msra.mxu0 0.0
        %853 = vmatprep.subr.mxu0 0.0
        %854 = vmatpush1.msra.mxu0 0.0
        %855 = vmatprep.subr.mxu0 0.0
        %856 = vmatpush1.msra.mxu0 0.0
        %857 = vmatprep.subr.mxu0 0.0
        %858 = vmatpush1.msra.mxu0 0.0
        %859 = vmatprep.subr.mxu0 0.0
        %860 = vmatpush1.msra.mxu0 0.0
        %861 = vmatprep.subr.mxu0 0.0
        %862 = vmatpush1.msra.mxu0 0.0
        %863 = vmatprep.subr.mxu0 0.0
        %864 = vmatpush1.msra.mxu0 0.0
        %865 = vmatprep.subr.mxu0 0.0
        %866 = vmatpush1.msra.mxu0 0.0
        %867 = vmatprep.subr.mxu0 0.0
        %868 = vmatpush1.msra.mxu0 %v835
        %869 = vmatprep.subr.mxu0 0.0
        %870 = vmatpush2.msra.mxu0 0.0
        %871 = vmatprep.subr.mxu0 0.0
        %872 = vmatpush2.msra.mxu0 0.0
        %873 = vmatprep.subr.mxu0 0.0
        %874 = vmatpush2.msra.mxu0 0.0
        %875 = vmatprep.subr.mxu0 0.0
        %876 = vmatpush2.msra.mxu0 0.0
        %877 = vmatprep.subr.mxu0 0.0
        %878 = vmatpush2.msra.mxu0 0.0
        %879 = vmatprep.subr.mxu0 0.0
        %880 = vmatpush2.msra.mxu0 0.0
        %881 = vmatprep.subr.mxu0 0.0
        %882 = vmatpush2.msra.mxu0 0.0
        %883 = vmatprep.subr.mxu0 0.0
        %884 = vmatpush2.msra.mxu0 0.0
        %885 = vmatprep.subr.mxu0 0.0
        %886 = vmatpush2.msra.mxu0 0.0
        %887 = vmatprep.subr.mxu0 0.0
        %888 = vmatpush2.msra.mxu0 0.0
        %889 = vmatprep.subr.mxu0 0.0
        %890 = vmatpush2.msra.mxu0 0.0
        %891 = vmatprep.subr.mxu0 0.0
        %892 = vmatpush2.msra.mxu0 0.0
        %893 = vmatprep.subr.mxu0 0.0
        %894 = vmatpush2.msra.mxu0 0.0
        %895 = vmatprep.subr.mxu0 0.0
        %896 = vmatpush2.msra.mxu0 0.0
        %897 = vmatprep.subr.mxu0 0.0
        %898 = vmatpush2.msra.mxu0 0.0
        %899 = vmatprep.subr.mxu0 0.0
        %900 = vmatpush2.msra.mxu0 0.0
        %901 = vmatprep.mubr.f32.mxu0 0.0
        %902 = vmatmul.mubr.f32.gmra.mxu0 %v829
        %v903 = vpop.f32.mrf.mxu0
        %v904 = vadd.f32 %v820, %v903
        %v905 = vpop.f32.mrf.mxu0
        %906 = vmatprep.mubr.f32.mxu0 0.0
        %907 = vmatmul.mubr.f32.gmra.mxu0 %v832
        %v908 = vpop.f32.mrf.mxu0
        %v909 = vadd.f32 %v825, %v908
        %v910 = vpop.f32.mrf.mxu0
        %911 = vdwg.mxu0
        %v912 = vld [vmem:[%s4] sm:$0x7f]
        %v914 = vsel %vm742, %v516, 0
        %v917 = vsel %vm742, %v517, 0
        %v920 = vsel %vm749, %v912, 0
        %922 = vmatprep.subr.mxu0 0.0
        %923 = vmatpush1.msra.mxu0 0.0
        %924 = vmatprep.subr.mxu0 0.0
        %925 = vmatpush1.msra.mxu0 0.0
        %926 = vmatprep.subr.mxu0 0.0
        %927 = vmatpush1.msra.mxu0 0.0
        %928 = vmatprep.subr.mxu0 0.0
        %929 = vmatpush1.msra.mxu0 0.0
        %930 = vmatprep.subr.mxu0 0.0
        %931 = vmatpush1.msra.mxu0 0.0
        %932 = vmatprep.subr.mxu0 0.0
        %933 = vmatpush1.msra.mxu0 0.0
        %934 = vmatprep.subr.mxu0 0.0
        %935 = vmatpush1.msra.mxu0 0.0
        %936 = vmatprep.subr.mxu0 0.0
        %937 = vmatpush1.msra.mxu0 0.0
        %938 = vmatprep.subr.mxu0 0.0
        %939 = vmatpush1.msra.mxu0 0.0
        %940 = vmatprep.subr.mxu0 0.0
        %941 = vmatpush1.msra.mxu0 0.0
        %942 = vmatprep.subr.mxu0 0.0
        %943 = vmatpush1.msra.mxu0 0.0
        %944 = vmatprep.subr.mxu0 0.0
        %945 = vmatpush1.msra.mxu0 0.0
        %946 = vmatprep.subr.mxu0 0.0
        %947 = vmatpush1.msra.mxu0 0.0
        %948 = vmatprep.subr.mxu0 0.0
        %949 = vmatpush1.msra.mxu0 0.0
        %950 = vmatprep.subr.mxu0 0.0
        %951 = vmatpush1.msra.mxu0 0.0
        %952 = vmatprep.subr.mxu0 0.0
        %953 = vmatpush1.msra.mxu0 %v920
        %954 = vmatprep.subr.mxu0 0.0
        %955 = vmatpush2.msra.mxu0 0.0
        %956 = vmatprep.subr.mxu0 0.0
        %957 = vmatpush2.msra.mxu0 0.0
        %958 = vmatprep.subr.mxu0 0.0
        %959 = vmatpush2.msra.mxu0 0.0
        %960 = vmatprep.subr.mxu0 0.0
        %961 = vmatpush2.msra.mxu0 0.0
        %962 = vmatprep.subr.mxu0 0.0
        %963 = vmatpush2.msra.mxu0 0.0
        %964 = vmatprep.subr.mxu0 0.0
        %965 = vmatpush2.msra.mxu0 0.0
        %966 = vmatprep.subr.mxu0 0.0
        %967 = vmatpush2.msra.mxu0 0.0
        %968 = vmatprep.subr.mxu0 0.0
        %969 = vmatpush2.msra.mxu0 0.0
        %970 = vmatprep.subr.mxu0 0.0
        %971 = vmatpush2.msra.mxu0 0.0
        %972 = vmatprep.subr.mxu0 0.0
        %973 = vmatpush2.msra.mxu0 0.0
        %974 = vmatprep.subr.mxu0 0.0
        %975 = vmatpush2.msra.mxu0 0.0
        %976 = vmatprep.subr.mxu0 0.0
        %977 = vmatpush2.msra.mxu0 0.0
        %978 = vmatprep.subr.mxu0 0.0
        %979 = vmatpush2.msra.mxu0 0.0
        %980 = vmatprep.subr.mxu0 0.0
        %981 = vmatpush2.msra.mxu0 0.0
        %982 = vmatprep.subr.mxu0 0.0
        %983 = vmatpush2.msra.mxu0 0.0
        %984 = vmatprep.subr.mxu0 0.0
        %985 = vmatpush2.msra.mxu0 0.0
        %986 = vmatprep.mubr.f32.mxu0 0.0
        %987 = vmatmul.mubr.f32.gmra.mxu0 %v914
        %v988 = vpop.f32.mrf.mxu0
        %v989 = vadd.f32 0.0, %v988
        %v990 = vpop.f32.mrf.mxu0
        %991 = vmatprep.mubr.f32.mxu0 0.0
        %992 = vmatmul.mubr.f32.gmra.mxu0 %v917
        %v993 = vpop.f32.mrf.mxu0
        %v994 = vadd.f32 0.0, %v993
        %v995 = vpop.f32.mrf.mxu0
        %996 = vdwg.mxu0
        %v997 = vadd.f32 %v904, %v989
        %v998 = vadd.f32 %v909, %v994
        %v999 = vld [vmem:[%s5] sm:$0x3]
        %vm1000 = vcmask 15360
        %v1002 = vsel %vm1000, %v635, 0
        %v1005 = vsel %vm1000, %v739, 0
        %vm1007 = vcmask 1041408
        %v1009 = vsel %vm1007, %v999, 0
        %1011 = vmatprep.subr.mxu0 0.0
        %1012 = vmatpush1.msra.mxu0 0.0
        %1013 = vmatprep.subr.mxu0 0.0
        %1014 = vmatpush1.msra.mxu0 0.0
        %1015 = vmatprep.subr.mxu0 0.0
        %1016 = vmatpush1.msra.mxu0 0.0
        %1017 = vmatprep.subr.mxu0 0.0
        %1018 = vmatpush1.msra.mxu0 0.0
        %1019 = vmatprep.subr.mxu0 0.0
        %1020 = vmatpush1.msra.mxu0 0.0
        %1021 = vmatprep.subr.mxu0 0.0
        %1022 = vmatpush1.msra.mxu0 0.0
        %1023 = vmatprep.subr.mxu0 0.0
        %1024 = vmatpush1.msra.mxu0 0.0
        %1025 = vmatprep.subr.mxu0 0.0
        %1026 = vmatpush1.msra.mxu0 0.0
        %1027 = vmatprep.subr.mxu0 0.0
        %1028 = vmatpush1.msra.mxu0 0.0
        %1029 = vmatprep.subr.mxu0 0.0
        %1030 = vmatpush1.msra.mxu0 0.0
        %1031 = vmatprep.subr.mxu0 0.0
        %1032 = vmatpush1.msra.mxu0 0.0
        %1033 = vmatprep.subr.mxu0 0.0
        %1034 = vmatpush1.msra.mxu0 0.0
        %1035 = vmatprep.subr.mxu0 0.0
        %1036 = vmatpush1.msra.mxu0 0.0
        %1037 = vmatprep.subr.mxu0 0.0
        %1038 = vmatpush1.msra.mxu0 0.0
        %1039 = vmatprep.subr.mxu0 0.0
        %1040 = vmatpush1.msra.mxu0 0.0
        %1041 = vmatprep.subr.mxu0 0.0
        %1042 = vmatpush1.msra.mxu0 %v1009
        %1043 = vmatprep.subr.mxu0 0.0
        %1044 = vmatpush2.msra.mxu0 0.0
        %1045 = vmatprep.subr.mxu0 0.0
        %1046 = vmatpush2.msra.mxu0 0.0
        %1047 = vmatprep.subr.mxu0 0.0
        %1048 = vmatpush2.msra.mxu0 0.0
        %1049 = vmatprep.subr.mxu0 0.0
        %1050 = vmatpush2.msra.mxu0 0.0
        %1051 = vmatprep.subr.mxu0 0.0
        %1052 = vmatpush2.msra.mxu0 0.0
        %1053 = vmatprep.subr.mxu0 0.0
        %1054 = vmatpush2.msra.mxu0 0.0
        %1055 = vmatprep.subr.mxu0 0.0
        %1056 = vmatpush2.msra.mxu0 0.0
        %1057 = vmatprep.subr.mxu0 0.0
        %1058 = vmatpush2.msra.mxu0 0.0
        %1059 = vmatprep.subr.mxu0 0.0
        %1060 = vmatpush2.msra.mxu0 0.0
        %1061 = vmatprep.subr.mxu0 0.0
        %1062 = vmatpush2.msra.mxu0 0.0
        %1063 = vmatprep.subr.mxu0 0.0
        %1064 = vmatpush2.msra.mxu0 0.0
        %1065 = vmatprep.subr.mxu0 0.0
        %1066 = vmatpush2.msra.mxu0 0.0
        %1067 = vmatprep.subr.mxu0 0.0
        %1068 = vmatpush2.msra.mxu0 0.0
        %1069 = vmatprep.subr.mxu0 0.0
        %1070 = vmatpush2.msra.mxu0 0.0
        %1071 = vmatprep.subr.mxu0 0.0
        %1072 = vmatpush2.msra.mxu0 0.0
        %1073 = vmatprep.subr.mxu0 0.0
        %1074 = vmatpush2.msra.mxu0 0.0
        %1075 = vmatprep.mubr.f32.mxu0 0.0
        %1076 = vmatmul.mubr.f32.gmra.mxu0 %v1002
        %v1077 = vpop.f32.mrf.mxu0
        %v1078 = vadd.f32 0.0, %v1077
        %v1079 = vpop.f32.mrf.mxu0
        %1080 = vmatprep.mubr.f32.mxu0 0.0
        %1081 = vmatmul.mubr.f32.gmra.mxu0 %v1005
        %v1082 = vpop.f32.mrf.mxu0
        %v1083 = vadd.f32 0.0, %v1082
        %v1084 = vpop.f32.mrf.mxu0
        %1085 = vdwg.mxu0
        %v1086 = vadd.f32 %v997, %v1078
        %v1087 = vadd.f32 %v998, %v1083
        %vm1088 = vcmask 523264
        %1089 = vst.msk [vmem:[%s245] sm:$0xff] %vm1088, %v1086
        %1090 = vst.msk [vmem:[%s245 + $0x8] sm:$0xff] %vm1088, %v1087
        %s1091 = sand.u32 %s159, 1
        %s1092 = scalar_lea.sflag [#allocation3], %s1091
        %s1093 = sand.u32 %s159, 1
        %s1094 = smul.addr %s1093, 16
        %s1095 = scalar_lea.vmem [#allocation2], %s1094
        // Predicated region
        $region45: #{tpu_custom_call.1} parent=43 // pred_check
          %p1096 = pneg %p169
        $region46: #{tpu_custom_call.1} parent=43 // pred_check_branch
          %1098 = sbr.rel (%p1096) target = $region48
        $region47: #{tpu_custom_call.1} parent=43 // pred_region
          %s1099 = smul.u32 2, %s20
          %s1101 = ssub.s32 256, 256
          %1102 = vsyncadd %s1092, %s1101
          %s1103 = smul.addr %s1099, 128
          %s1104 = scalar_lea.hbm %s6, %s1103
          %s1105 = sshll.u32 %s1095, 4
          %s1106 = int_to_ptr.vmem [resolvable:$true] %s1105
          %1111 = dma.vmem_to_hbm [thread:$0]  %s1106, 256, %s1104, %s1092, 128, 128, 8
        $region48: #{tpu_custom_call.1} parent=43 // pred_fallthru
          _
      $region44: #{tpu_custom_call.1} parent=5 // pred_fallthru
        _
      %p1112 = scmp.le.s32.totalorder 2, %s15
      // Predicated region
      $region49: #{tpu_custom_call.1} parent=5 // pred_check
        %p1113 = pneg %p1112
      $region50: #{tpu_custom_call.1} parent=5 // pred_check_branch
        %1115 = sbr.rel (%p1113) target = $region52
      $region51: #{tpu_custom_call.1} parent=5 // pred_region
        %s1116 = ssub.s32 %s15, 2
        // Predicated region
        $region53: #{tpu_custom_call.1} parent=51 // pred_check
          %p1117 = pneg %p175
        $region54: #{tpu_custom_call.1} parent=51 // pred_check_branch
          %1119 = sbr.rel (%p1117) target = $region56
        $region55: #{tpu_custom_call.1} parent=51 // pred_region
          %s1120 = sand.u32 %s160, 1
          %s1121 = scalar_lea.sflag [#allocation3], %s1120
          %s1122 = sand.u32 %s160, 1
          %s1123 = smul.addr %s1122, 16
          %s1124 = scalar_lea.vmem [#allocation2], %s1123
          %1125 = dma.done %s1121, 256
        $region56: #{tpu_custom_call.1} parent=51 // pred_fallthru
          _
      $region52: #{tpu_custom_call.1} parent=5 // pred_fallthru
        _
    $region6: #{tpu_custom_call.1} parent=1 // loop_footer
      %s19 = sadd.s32 1, %s15
    $region7: #{tpu_custom_call.1} parent=1 // loop_footer_branch
      %14 = sbr.rel target = $region3
    $region8: #{tpu_custom_call.1} parent=1 // loop_exit
      _
    %1126 = vsyncpa [#allocation3], 1
    %s1127 = scalar_lea.sflag [#allocation3], 1
    %1128 = vsyncpa %s1127, 1

</llo_original>
